<compile_context>
chip_gen: v5e
topology: v5e:2x2
jax: 0.10.0
libtpu: 0.0.40
codegen_flags: <defaults>
</compile_context>

<pallas_src>
import functools

import jax
import jax.numpy as jnp
from jax.experimental import pallas as pl
from jax.experimental.pallas import tpu as pltpu


LANE = 128  # pad fc_class output dim up to a lane-dense multiple of 128


# ---------------------------------------------------------------------------
# Pallas kernel: mean-pool over seq (tiled reduction) + fc_class linear
# ---------------------------------------------------------------------------

def bert_finetune_kernel(x_ref, w_ref, b_ref, o_ref, acc_ref, *, inv_s):
    # x_ref: (TB, TS, D)  w_ref: (D, Npad)  b_ref: (1, Npad)
    # o_ref: (TB, Npad)   acc_ref: (TB, D) f32 scratch (persists over seq axis)
    k = pl.program_id(1)

    @pl.when(k == 0)
    def _():
        acc_ref[...] = jnp.zeros_like(acc_ref)

    # always accumulate the sequence sum in f32 (input may be bf16)
    x = x_ref[...].astype(jnp.float32)
    acc_ref[...] += jnp.sum(x, axis=1)                        # (TB, D)

    @pl.when(k == pl.num_programs(1) - 1)
    def _():
        pooled = acc_ref[...] * jnp.float32(inv_s)            # mean over true S
        o_ref[...] = (
            jnp.dot(pooled, w_ref[...], preferred_element_type=jnp.float32)
            + b_ref[...]                                      # (1, Npad) broadcast
        ).astype(o_ref.dtype)


# ---------------------------------------------------------------------------
# One-time classifier padding (do NOT redo this every forward call)
# ---------------------------------------------------------------------------

def prepare_classifier(params):
    n_cat = params["fc_class_b"].shape[0]
    d = params["fc_class_w"].shape[0]
    n_pad = ((n_cat + LANE - 1) // LANE) * LANE               # >= 128, lane-dense
    w_pad = jnp.zeros((d, n_pad), jnp.float32).at[:, :n_cat].set(params["fc_class_w"])
    b_pad = jnp.zeros((1, n_pad), jnp.float32).at[0, :n_cat].set(params["fc_class_b"])
    return w_pad, b_pad, n_cat


# ---------------------------------------------------------------------------
# Wrapper
# ---------------------------------------------------------------------------

def bert_finetuning_forward(padded_classifier, last_layer, *,
                            input_length, batch_size, tb=8, ts=None):
    """last_layer: (B, S, 768) BERT final hidden states -> (out_class, zeros)."""
    w_pad, b_pad, n_cat = padded_classifier
    B, S, D = last_layer.shape
    n_pad = w_pad.shape[1]

    # tile sizes: TB multiple of 8 (sublane-aligned), TS caps per-step VMEM so
    # the footprint is independent of S (safe on v7x's 64 MiB VMEM).
    tb = max(8, (tb // 8) * 8)
    if ts is None:
        ts = S if S <= 512 else 512

    # host-side zero padding for ragged B / S (zeros don't change the sum;
    # we divide by the true S, and padded batch rows are sliced off below).
    b_full = ((B + tb - 1) // tb) * tb
    s_full = ((S + ts - 1) // ts) * ts
    x = last_layer
    if (b_full, s_full) != (B, S):
        x = jnp.zeros((b_full, s_full, D), last_layer.dtype).at[:B, :S, :].set(last_layer)

    grid = (b_full // tb, s_full // ts)
    inv_s = 1.0 / float(S)
    itemsize = jnp.dtype(x.dtype).itemsize

    # scoped-VMEM budget: double-buffered x tiles + weights + bias + out + acc
    tile_bytes = (2 * tb * ts * D * itemsize          # x double buffer
                  + 2 * D * n_pad * 4                 # weights
                  + 2 * 1 * n_pad * 4                 # bias
                  + 2 * tb * n_pad * 4                # output
                  + tb * D * 4)                       # f32 accumulator scratch
    vmem_bytes = min(max(2 * tile_bytes, 32 << 20), 100 << 20)

    out_pad = pl.pallas_call(
        functools.partial(bert_finetune_kernel, inv_s=inv_s),
        out_shape=jax.ShapeDtypeStruct((b_full, n_pad), jnp.float32),
        grid_spec=pltpu.PrefetchScalarGridSpec(
            num_scalar_prefetch=0,
            grid=grid,
            in_specs=[
                pl.BlockSpec((tb, ts, D), lambda i, k: (i, k, 0)),
                pl.BlockSpec((D, n_pad), lambda i, k: (0, 0)),
                pl.BlockSpec((1, n_pad), lambda i, k: (0, 0)),
            ],
            out_specs=pl.BlockSpec((tb, n_pad), lambda i, k: (i, 0)),
            scratch_shapes=[pltpu.VMEM((tb, D), jnp.float32)],
        ),
        compiler_params=pltpu.CompilerParams(
            dimension_semantics=("parallel", "arbitrary"),
            vmem_limit_bytes=vmem_bytes,
        ),
        cost_estimate=pl.CostEstimate(
            flops=2 * b_full * D * n_pad + b_full * s_full * D,
            bytes_accessed=(b_full * s_full * D * itemsize
                            + D * n_pad * 4 + b_full * n_pad * 4),
            transcendentals=0,
        ),
    )(x, w_pad, b_pad)

    out_class = out_pad[:B, :n_cat]                           # drop pad rows/cols
    # second return value of the torch forward: constant zeros, no compute
    out_zeros = jnp.zeros((input_length, batch_size, 76), jnp.float32)
    return out_class, out_zeros


def init_params(key, hidden=768, n_categories=18):
    k1, k2 = jax.random.split(key)
    s = 0.02
    return {
        "fc_class_w": s * jax.random.normal(k1, (hidden, n_categories), jnp.float32),
        "fc_class_b": s * jax.random.normal(k2, (n_categories,), jnp.float32),
    }


# ---------------------------------------------------------------------------
# main
# ---------------------------------------------------------------------------

if __name__ == "__main__":
    B, S, D = 2, 8, 768            # batch_size, input_length (seq), BERT hidden size
    N_CAT = 18                     # len(all_categories) in the names dataset

    key = jax.random.PRNGKey(0)
    pkey, xkey = jax.random.split(key)
    params = init_params(pkey, hidden=D, n_categories=N_CAT)
    padded_classifier = prepare_classifier(params)            # built ONCE

    # deterministic stand-in for bert(x)[0] -- the pretrained BERT's last_layer
    last_layer = jax.random.normal(xkey, (B, S, D), jnp.float32)

    out_class, out_zeros = bert_finetuning_forward(
        padded_classifier, last_layer, input_length=S, batch_size=B)
    jax.block_until_ready((out_class, out_zeros))
    assert out_class.shape == (B, N_CAT)
    assert out_zeros.shape == (S, B, 76)

    # ---- pure-JAX reference check (f32) ----
    ref_class = jnp.mean(last_layer, axis=1) @ params["fc_class_w"] + params["fc_class_b"]
    assert jnp.allclose(out_class, ref_class, atol=1e-4), "fc_class mismatch (f32)"
    assert jnp.allclose(out_zeros, 0.0), "zeros output mismatch"

    # ---- bf16 input path (halves HBM bytes; f32 accumulation inside kernel) ----
    last_layer_bf16 = last_layer.astype(jnp.bfloat16)
    out_bf16, _ = bert_finetuning_forward(
        padded_classifier, last_layer_bf16, input_length=S, batch_size=B)
    jax.block_until_ready(out_bf16)
    ref_bf16 = (jnp.mean(last_layer_bf16.astype(jnp.float32), axis=1)
                @ params["fc_class_w"] + params["fc_class_b"])
    assert jnp.allclose(out_bf16, ref_bf16, atol=1e-2), "fc_class mismatch (bf16)"

    print("KERNEL_OK")
</pallas_src>

<mosaic_0001>
module attributes {stable_mosaic.version = 11 : i64} {
  func.func @bert_finetune_kernel(%arg0: i32, %arg1: i32, %arg2: memref<8x8x768xf32, #tpu.memory_space<vmem>>, %arg3: memref<768x128xf32, #tpu.memory_space<vmem>>, %arg4: memref<1x128xf32, #tpu.memory_space<vmem>>, %arg5: memref<8x128xf32, #tpu.memory_space<vmem>>, %arg6: memref<8x768xf32, #tpu.memory_space<vmem>>) attributes {dimension_semantics = [#tpu.dimension_semantics<parallel>, #tpu.dimension_semantics<arbitrary>], iteration_bounds = array<i64: 1, 1>, scalar_prefetch = 0 : i64, scratch_operands = 1 : i64, tpu.core_type = #tpu.core_type<tc>, window_params = [{transform_indices = @transform_0, window_bounds = array<i64: 8, 8, 768>}, {pipeline_mode = #tpu.pipeline_mode<synchronous>, transform_indices = @transform_1, window_bounds = array<i64: 768, 128>}, {pipeline_mode = #tpu.pipeline_mode<synchronous>, transform_indices = @transform_2, window_bounds = array<i64: 1, 128>}, {transform_indices = @transform_3, window_bounds = array<i64: 8, 128>}]} {
    %c0_i32 = arith.constant 0 : i32
    %0 = arith.cmpi eq, %arg1, %c0_i32 : i32
    %1 = arith.extui %0 : i1 to i32
    %c0_i32_0 = arith.constant 0 : i32
    %2 = arith.cmpi ne, %1, %c0_i32_0 : i32
    scf.if %2 {
      %cst_9 = arith.constant 0.000000e+00 : f32
      %11 = vector.broadcast %cst_9 : f32 to vector<8x768xf32>
      %c0_10 = arith.constant 0 : index
      %c0_11 = arith.constant 0 : index
      %12 = vector.load %arg6[%c0_10, %c0_11] : memref<8x768xf32, #tpu.memory_space<vmem>>, vector<8x768xf32>
      tpu.vector_store %arg6[%c0_10, %c0_11], %11 {strides = array<i32>} : memref<8x768xf32, #tpu.memory_space<vmem>>, vector<8x768xf32>,
    } else {
    }
    %c0 = arith.constant 0 : index
    %c0_1 = arith.constant 0 : index
    %c0_2 = arith.constant 0 : index
    %3 = vector.load %arg2[%c0, %c0_1, %c0_2] : memref<8x8x768xf32, #tpu.memory_space<vmem>>, vector<8x8x768xf32>
    %c0_3 = arith.constant 0 : index
    %c0_4 = arith.constant 0 : index
    %4 = vector.load %arg6[%c0_3, %c0_4] : memref<8x768xf32, #tpu.memory_space<vmem>>, vector<8x768xf32>
    %cst = arith.constant dense<0.000000e+00> : vector<8x768xf32>
    %5 = vector.multi_reduction <add>, %3, %cst [1] : vector<8x8x768xf32> to vector<8x768xf32>
    %6 = arith.addf %4, %5 : vector<8x768xf32>
    %c0_5 = arith.constant 0 : index
    %c0_6 = arith.constant 0 : index
    %7 = vector.load %arg6[%c0_5, %c0_6] : memref<8x768xf32, #tpu.memory_space<vmem>>, vector<8x768xf32>
    tpu.vector_store %arg6[%c0_5, %c0_6], %6 {strides = array<i32>} : memref<8x768xf32, #tpu.memory_space<vmem>>, vector<8x768xf32>,
    %c0_i32_7 = arith.constant 0 : i32
    %8 = arith.cmpi eq, %arg1, %c0_i32_7 : i32
    %9 = arith.extui %8 : i1 to i32
    %c0_i32_8 = arith.constant 0 : i32
    %10 = arith.cmpi ne, %9, %c0_i32_8 : i32
    scf.if %10 {
      %c0_9 = arith.constant 0 : index
      %c0_10 = arith.constant 0 : index
      %11 = vector.load %arg6[%c0_9, %c0_10] : memref<8x768xf32, #tpu.memory_space<vmem>>, vector<8x768xf32>
      %cst_11 = arith.constant 1.250000e-01 : f32
      %12 = vector.broadcast %cst_11 : f32 to vector<8x768xf32>
      %13 = arith.mulf %11, %12 : vector<8x768xf32>
      %c0_12 = arith.constant 0 : index
      %c0_13 = arith.constant 0 : index
      %14 = vector.load %arg3[%c0_12, %c0_13] : memref<768x128xf32, #tpu.memory_space<vmem>>, vector<768x128xf32>
      %cst_14 = arith.constant dense<0.000000e+00> : vector<8x128xf32>
      %15 = tpu.matmul %13, %14, %cst_14 {dimension_numbers = #tpu.dot_dimension_numbers<[1], [0], [0], [1], [0, 0, 1, 1], [], []>} : vector<8x768xf32>, vector<768x128xf32>, vector<8x128xf32> -> vector<8x128xf32>
      %c0_15 = arith.constant 0 : index
      %c0_16 = arith.constant 0 : index
      %16 = vector.load %arg4[%c0_15, %c0_16] : memref<1x128xf32, #tpu.memory_space<vmem>>, vector<1x128xf32>
      %17 = vector.broadcast %16 : vector<1x128xf32> to vector<8x128xf32>
      %18 = arith.addf %15, %17 : vector<8x128xf32>
      %c0_17 = arith.constant 0 : index
      %c0_18 = arith.constant 0 : index
      %19 = vector.load %arg5[%c0_17, %c0_18] : memref<8x128xf32, #tpu.memory_space<vmem>>, vector<8x128xf32>
      tpu.vector_store %arg5[%c0_17, %c0_18], %18 {strides = array<i32>} : memref<8x128xf32, #tpu.memory_space<vmem>>, vector<8x128xf32>,
    } else {
    }
    return
  }
  func.func @transform_0(%arg0: i32, %arg1: i32) -> (i32, i32, i32) {
    %c0_i32 = arith.constant 0 : i32
    %c0_i32_0 = arith.constant 0 : i32
    return %arg0, %arg1, %c0_i32 : i32, i32, i32
  }
  func.func @transform_1(%arg0: i32, %arg1: i32) -> (i32, i32) {
    %c0_i32 = arith.constant 0 : i32
    %c0_i32_0 = arith.constant 0 : i32
    %c0_i32_1 = arith.constant 0 : i32
    return %c0_i32, %c0_i32_0 : i32, i32
  }
  func.func @transform_2(%arg0: i32, %arg1: i32) -> (i32, i32) {
    %c0_i32 = arith.constant 0 : i32
    %c0_i32_0 = arith.constant 0 : i32
    %c0_i32_1 = arith.constant 0 : i32
    return %c0_i32, %c0_i32_0 : i32, i32
  }
  func.func @transform_3(%arg0: i32, %arg1: i32) -> (i32, i32) {
    %c0_i32 = arith.constant 0 : i32
    %c0_i32_0 = arith.constant 0 : i32
    return %arg0, %c0_i32 : i32, i32
  }
}

</mosaic_0001>

<llo_original>
// kernel: tpu_custom_call.1
$region0: #{tpu_custom_call.1}
  #allocation0 [shape = 'u32[]', space=smem, size = 0x4, offset = 0x4, fixed_abs, tag = 'smem constant byte address 0x4 - core index']
  #allocation1 [shape = 'u32[72,128]{1,0:T(1,128)}', space=vmem, size = 0x9000, scoped, tag = 'internal scratch']
  #allocation2 [shape = 'f32[8,768]{1,0:T(8,128)}', space=vmem, size = 0x6000, scoped, tag = 'scratch operand']
  %s0 = inlined_call_operand.hbm [shape: f32[8,8,768], index: 0, kind: input, shape index: {}]
  %s1 = inlined_call_operand.hbm [shape: f32[768,128], index: 1, kind: input, shape index: {}]
  %s2 = inlined_call_operand.vmem [shape: f32[1,128], index: 2, kind: input, shape index: {}]
  %s3 = inlined_call_operand.hbm [shape: f32[8,128], index: 3, kind: output, shape index: {}]
  %s4 = sld [smem:[#allocation0]]
  $region38: #{tpu_custom_call.1} parent=0
    _
  %s6 = ssub.s32 1, %s4
  %s7 = scalar_select 0, %s6, %s4
  $region1: #{tpu_custom_call.1} parent=0
    #allocation3 [shape = 'u8[196608]{0}', space=vmem, size = 0x30000, scoped, tag = 'input window, operand 0, single buffered']
    #allocation4 [shape = 's32[1]{0}', space=sflag, size = 0x4, scoped, tag = 'scoped memory for tpu_custom_call.1']
    #allocation5 [shape = 's32[1]{0}', space=sflag, size = 0x4, scoped, tag = 'scoped memory for tpu_custom_call.1']
    #allocation6 [shape = 'u8[393216]{0}', space=vmem, size = 0x60000, scoped, tag = 'input window, operand 1, single buffered']
    #allocation7 [shape = 's32[1]{0}', space=sflag, size = 0x4, scoped, tag = 'scoped memory for tpu_custom_call.1']
    #allocation8 [shape = 'u8[4096]{0}', space=vmem, size = 0x1000, scoped, tag = 'output window, operand 0, single buffered']
    %8 = vsyncpa [#allocation4], 0
    %9 = vsyncpa [#allocation7], 0
    %10 = vsyncpa [#allocation5], 0
    // Predicated region
    $region2: #{tpu_custom_call.1} parent=1 // pred_check
      _
    $region3: #{tpu_custom_call.1} parent=1 // pred_check_branch
      %12 = sbr.rel (0) target = $region5
    $region4: #{tpu_custom_call.1} parent=1 // pred_region
      %14 = vsyncadd [#allocation4], 0
      %s15 = sshll.u32 %s0, 4
      %s16 = int_to_ptr.hbm [resolvable:$true] %s15
      %s17 = sshll.u32 [#allocation3], 4
      %s18 = int_to_ptr.vmem [resolvable:$true] %s17
      %23 = dma.hbm_to_vmem [thread:$0]  %s16, 6144, %s18, [#allocation4], 768, 768, 48
    $region5: #{tpu_custom_call.1} parent=1 // pred_fallthru
      _
    // Predicated region
    $region6: #{tpu_custom_call.1} parent=1 // pred_check
      _
    $region7: #{tpu_custom_call.1} parent=1 // pred_check_branch
      %25 = sbr.rel (0) target = $region9
    $region8: #{tpu_custom_call.1} parent=1 // pred_region
      %27 = vsyncadd [#allocation7], 0
      %s28 = sshll.u32 %s1, 4
      %s29 = int_to_ptr.hbm [resolvable:$true] %s28
      %s30 = sshll.u32 [#allocation6], 4
      %s31 = int_to_ptr.vmem [resolvable:$true] %s30
      %36 = dma.hbm_to_vmem [thread:$0]  %s29, 12288, %s31, [#allocation7], 128, 128, 8
    $region9: #{tpu_custom_call.1} parent=1 // pred_fallthru
      _
    // Predicated region
    $region10: #{tpu_custom_call.1} parent=1 // pred_check
      _
    $region11: #{tpu_custom_call.1} parent=1 // pred_check_branch
      %38 = sbr.rel (0) target = $region13
    $region12: #{tpu_custom_call.1} parent=1 // pred_region
      _
    $region13: #{tpu_custom_call.1} parent=1 // pred_fallthru
      _
    // Predicated region
    $region14: #{tpu_custom_call.1} parent=1 // pred_check
      _
    $region15: #{tpu_custom_call.1} parent=1 // pred_check_branch
      %40 = sbr.rel (0) target = $region17
    $region16: #{tpu_custom_call.1} parent=1 // pred_region
      %42 = dma.done [#allocation4], 6144
    $region17: #{tpu_custom_call.1} parent=1 // pred_fallthru
      _
    // Predicated region
    $region18: #{tpu_custom_call.1} parent=1 // pred_check
      _
    $region19: #{tpu_custom_call.1} parent=1 // pred_check_branch
      %44 = sbr.rel (0) target = $region21
    $region20: #{tpu_custom_call.1} parent=1 // pred_region
      %46 = dma.done [#allocation7], 12288
    $region21: #{tpu_custom_call.1} parent=1 // pred_fallthru
      _
    %p47 = scmp.eq.s32.totalorder 0, 0
    // Predicated region
    $region22: #{tpu_custom_call.1} parent=1 // pred_check
      %p48 = pneg %p47
    $region23: #{tpu_custom_call.1} parent=1 // pred_check_branch
      %50 = sbr.rel (%p48) target = $region25
    $region24: #{tpu_custom_call.1} parent=1 // pred_region
      %51 = vst [vmem:[#allocation2] sm:$0xff] 0.0
      %52 = vst [vmem:[#allocation2 + $0x8] sm:$0xff] 0.0
      %53 = vst [vmem:[#allocation2 + $0x10] sm:$0xff] 0.0
      %54 = vst [vmem:[#allocation2 + $0x18] sm:$0xff] 0.0
      %55 = vst [vmem:[#allocation2 + $0x20] sm:$0xff] 0.0
      %56 = vst [vmem:[#allocation2 + $0x28] sm:$0xff] 0.0
    $region25: #{tpu_custom_call.1} parent=1 // pred_fallthru
      _
    %v57 = vld [vmem:[#allocation3] sm:$0xff]
    %v58 = vld [vmem:[#allocation3 + $0x8] sm:$0xff]
    %v59 = vld [vmem:[#allocation3 + $0x10] sm:$0xff]
    %v60 = vld [vmem:[#allocation3 + $0x18] sm:$0xff]
    %v61 = vld [vmem:[#allocation3 + $0x20] sm:$0xff]
    %v62 = vld [vmem:[#allocation3 + $0x28] sm:$0xff]
    %v63 = vld [vmem:[#allocation3 + $0x30] sm:$0xff]
    %v64 = vld [vmem:[#allocation3 + $0x38] sm:$0xff]
    %v65 = vld [vmem:[#allocation3 + $0x40] sm:$0xff]
    %v66 = vld [vmem:[#allocation3 + $0x48] sm:$0xff]
    %v67 = vld [vmem:[#allocation3 + $0x50] sm:$0xff]
    %v68 = vld [vmem:[#allocation3 + $0x58] sm:$0xff]
    %v69 = vld [vmem:[#allocation3 + $0x60] sm:$0xff]
    %v70 = vld [vmem:[#allocation3 + $0x68] sm:$0xff]
    %v71 = vld [vmem:[#allocation3 + $0x70] sm:$0xff]
    %v72 = vld [vmem:[#allocation3 + $0x78] sm:$0xff]
    %v73 = vld [vmem:[#allocation3 + $0x80] sm:$0xff]
    %v74 = vld [vmem:[#allocation3 + $0x88] sm:$0xff]
    %v75 = vld [vmem:[#allocation3 + $0x90] sm:$0xff]
    %v76 = vld [vmem:[#allocation3 + $0x98] sm:$0xff]
    %v77 = vld [vmem:[#allocation3 + $0xa0] sm:$0xff]
    %v78 = vld [vmem:[#allocation3 + $0xa8] sm:$0xff]
    %v79 = vld [vmem:[#allocation3 + $0xb0] sm:$0xff]
    %v80 = vld [vmem:[#allocation3 + $0xb8] sm:$0xff]
    %v81 = vld [vmem:[#allocation3 + $0xc0] sm:$0xff]
    %v82 = vld [vmem:[#allocation3 + $0xc8] sm:$0xff]
    %v83 = vld [vmem:[#allocation3 + $0xd0] sm:$0xff]
    %v84 = vld [vmem:[#allocation3 + $0xd8] sm:$0xff]
    %v85 = vld [vmem:[#allocation3 + $0xe0] sm:$0xff]
    %v86 = vld [vmem:[#allocation3 + $0xe8] sm:$0xff]
    %v87 = vld [vmem:[#allocation3 + $0xf0] sm:$0xff]
    %v88 = vld [vmem:[#allocation3 + $0xf8] sm:$0xff]
    %v89 = vld [vmem:[#allocation3 + $0x100] sm:$0xff]
    %v90 = vld [vmem:[#allocation3 + $0x108] sm:$0xff]
    %v91 = vld [vmem:[#allocation3 + $0x110] sm:$0xff]
    %v92 = vld [vmem:[#allocation3 + $0x118] sm:$0xff]
    %v93 = vld [vmem:[#allocation3 + $0x120] sm:$0xff]
    %v94 = vld [vmem:[#allocation3 + $0x128] sm:$0xff]
    %v95 = vld [vmem:[#allocation3 + $0x130] sm:$0xff]
    %v96 = vld [vmem:[#allocation3 + $0x138] sm:$0xff]
    %v97 = vld [vmem:[#allocation3 + $0x140] sm:$0xff]
    %v98 = vld [vmem:[#allocation3 + $0x148] sm:$0xff]
    %v99 = vld [vmem:[#allocation3 + $0x150] sm:$0xff]
    %v100 = vld [vmem:[#allocation3 + $0x158] sm:$0xff]
    %v101 = vld [vmem:[#allocation3 + $0x160] sm:$0xff]
    %v102 = vld [vmem:[#allocation3 + $0x168] sm:$0xff]
    %v103 = vld [vmem:[#allocation3 + $0x170] sm:$0xff]
    %v104 = vld [vmem:[#allocation3 + $0x178] sm:$0xff]
    %v105 = vld [vmem:[#allocation2] sm:$0xff]
    %v106 = vld [vmem:[#allocation2 + $0x8] sm:$0xff]
    %v107 = vld [vmem:[#allocation2 + $0x10] sm:$0xff]
    %v108 = vld [vmem:[#allocation2 + $0x18] sm:$0xff]
    %v109 = vld [vmem:[#allocation2 + $0x20] sm:$0xff]
    %v110 = vld [vmem:[#allocation2 + $0x28] sm:$0xff]
    %v111 = vrot.slane %v57, 4
    %v112 = vadd.f32 %v57, %v111
    %v113 = vrot.slane %v112, 2
    %v114 = vadd.f32 %v112, %v113
    %v115 = vrot.slane %v114, 1
    %v116 = vadd.f32 %v114, %v115
    %v117 = vrot.slane %v58, 4
    %v118 = vadd.f32 %v58, %v117
    %v119 = vrot.slane %v118, 2
    %v120 = vadd.f32 %v118, %v119
    %v121 = vrot.slane %v120, 1
    %v122 = vadd.f32 %v120, %v121
    %v123 = vrot.slane %v59, 4
    %v124 = vadd.f32 %v59, %v123
    %v125 = vrot.slane %v124, 2
    %v126 = vadd.f32 %v124, %v125
    %v127 = vrot.slane %v126, 1
    %v128 = vadd.f32 %v126, %v127
    %v129 = vrot.slane %v60, 4
    %v130 = vadd.f32 %v60, %v129
    %v131 = vrot.slane %v130, 2
    %v132 = vadd.f32 %v130, %v131
    %v133 = vrot.slane %v132, 1
    %v134 = vadd.f32 %v132, %v133
    %v135 = vrot.slane %v61, 4
    %v136 = vadd.f32 %v61, %v135
    %v137 = vrot.slane %v136, 2
    %v138 = vadd.f32 %v136, %v137
    %v139 = vrot.slane %v138, 1
    %v140 = vadd.f32 %v138, %v139
    %v141 = vrot.slane %v62, 4
    %v142 = vadd.f32 %v62, %v141
    %v143 = vrot.slane %v142, 2
    %v144 = vadd.f32 %v142, %v143
    %v145 = vrot.slane %v144, 1
    %v146 = vadd.f32 %v144, %v145
    %v147 = vrot.slane %v63, 4
    %v148 = vadd.f32 %v63, %v147
    %v149 = vrot.slane %v148, 2
    %v150 = vadd.f32 %v148, %v149
    %v151 = vrot.slane %v150, 1
    %v152 = vadd.f32 %v150, %v151
    %v153 = vrot.slane %v64, 4
    %v154 = vadd.f32 %v64, %v153
    %v155 = vrot.slane %v154, 2
    %v156 = vadd.f32 %v154, %v155
    %v157 = vrot.slane %v156, 1
    %v158 = vadd.f32 %v156, %v157
    %v159 = vrot.slane %v65, 4
    %v160 = vadd.f32 %v65, %v159
    %v161 = vrot.slane %v160, 2
    %v162 = vadd.f32 %v160, %v161
    %v163 = vrot.slane %v162, 1
    %v164 = vadd.f32 %v162, %v163
    %v165 = vrot.slane %v66, 4
    %v166 = vadd.f32 %v66, %v165
    %v167 = vrot.slane %v166, 2
    %v168 = vadd.f32 %v166, %v167
    %v169 = vrot.slane %v168, 1
    %v170 = vadd.f32 %v168, %v169
    %v171 = vrot.slane %v67, 4
    %v172 = vadd.f32 %v67, %v171
    %v173 = vrot.slane %v172, 2
    %v174 = vadd.f32 %v172, %v173
    %v175 = vrot.slane %v174, 1
    %v176 = vadd.f32 %v174, %v175
    %v177 = vrot.slane %v68, 4
    %v178 = vadd.f32 %v68, %v177
    %v179 = vrot.slane %v178, 2
    %v180 = vadd.f32 %v178, %v179
    %v181 = vrot.slane %v180, 1
    %v182 = vadd.f32 %v180, %v181
    %v183 = vrot.slane %v69, 4
    %v184 = vadd.f32 %v69, %v183
    %v185 = vrot.slane %v184, 2
    %v186 = vadd.f32 %v184, %v185
    %v187 = vrot.slane %v186, 1
    %v188 = vadd.f32 %v186, %v187
    %v189 = vrot.slane %v70, 4
    %v190 = vadd.f32 %v70, %v189
    %v191 = vrot.slane %v190, 2
    %v192 = vadd.f32 %v190, %v191
    %v193 = vrot.slane %v192, 1
    %v194 = vadd.f32 %v192, %v193
    %v195 = vrot.slane %v71, 4
    %v196 = vadd.f32 %v71, %v195
    %v197 = vrot.slane %v196, 2
    %v198 = vadd.f32 %v196, %v197
    %v199 = vrot.slane %v198, 1
    %v200 = vadd.f32 %v198, %v199
    %v201 = vrot.slane %v72, 4
    %v202 = vadd.f32 %v72, %v201
    %v203 = vrot.slane %v202, 2
    %v204 = vadd.f32 %v202, %v203
    %v205 = vrot.slane %v204, 1
    %v206 = vadd.f32 %v204, %v205
    %v207 = vrot.slane %v73, 4
    %v208 = vadd.f32 %v73, %v207
    %v209 = vrot.slane %v208, 2
    %v210 = vadd.f32 %v208, %v209
    %v211 = vrot.slane %v210, 1
    %v212 = vadd.f32 %v210, %v211
    %v213 = vrot.slane %v74, 4
    %v214 = vadd.f32 %v74, %v213
    %v215 = vrot.slane %v214, 2
    %v216 = vadd.f32 %v214, %v215
    %v217 = vrot.slane %v216, 1
    %v218 = vadd.f32 %v216, %v217
    %v219 = vrot.slane %v75, 4
    %v220 = vadd.f32 %v75, %v219
    %v221 = vrot.slane %v220, 2
    %v222 = vadd.f32 %v220, %v221
    %v223 = vrot.slane %v222, 1
    %v224 = vadd.f32 %v222, %v223
    %v225 = vrot.slane %v76, 4
    %v226 = vadd.f32 %v76, %v225
    %v227 = vrot.slane %v226, 2
    %v228 = vadd.f32 %v226, %v227
    %v229 = vrot.slane %v228, 1
    %v230 = vadd.f32 %v228, %v229
    %v231 = vrot.slane %v77, 4
    %v232 = vadd.f32 %v77, %v231
    %v233 = vrot.slane %v232, 2
    %v234 = vadd.f32 %v232, %v233
    %v235 = vrot.slane %v234, 1
    %v236 = vadd.f32 %v234, %v235
    %v237 = vrot.slane %v78, 4
    %v238 = vadd.f32 %v78, %v237
    %v239 = vrot.slane %v238, 2
    %v240 = vadd.f32 %v238, %v239
    %v241 = vrot.slane %v240, 1
    %v242 = vadd.f32 %v240, %v241
    %v243 = vrot.slane %v79, 4
    %v244 = vadd.f32 %v79, %v243
    %v245 = vrot.slane %v244, 2
    %v246 = vadd.f32 %v244, %v245
    %v247 = vrot.slane %v246, 1
    %v248 = vadd.f32 %v246, %v247
    %v249 = vrot.slane %v80, 4
    %v250 = vadd.f32 %v80, %v249
    %v251 = vrot.slane %v250, 2
    %v252 = vadd.f32 %v250, %v251
    %v253 = vrot.slane %v252, 1
    %v254 = vadd.f32 %v252, %v253
    %v255 = vrot.slane %v81, 4
    %v256 = vadd.f32 %v81, %v255
    %v257 = vrot.slane %v256, 2
    %v258 = vadd.f32 %v256, %v257
    %v259 = vrot.slane %v258, 1
    %v260 = vadd.f32 %v258, %v259
    %v261 = vrot.slane %v82, 4
    %v262 = vadd.f32 %v82, %v261
    %v263 = vrot.slane %v262, 2
    %v264 = vadd.f32 %v262, %v263
    %v265 = vrot.slane %v264, 1
    %v266 = vadd.f32 %v264, %v265
    %v267 = vrot.slane %v83, 4
    %v268 = vadd.f32 %v83, %v267
    %v269 = vrot.slane %v268, 2
    %v270 = vadd.f32 %v268, %v269
    %v271 = vrot.slane %v270, 1
    %v272 = vadd.f32 %v270, %v271
    %v273 = vrot.slane %v84, 4
    %v274 = vadd.f32 %v84, %v273
    %v275 = vrot.slane %v274, 2
    %v276 = vadd.f32 %v274, %v275
    %v277 = vrot.slane %v276, 1
    %v278 = vadd.f32 %v276, %v277
    %v279 = vrot.slane %v85, 4
    %v280 = vadd.f32 %v85, %v279
    %v281 = vrot.slane %v280, 2
    %v282 = vadd.f32 %v280, %v281
    %v283 = vrot.slane %v282, 1
    %v284 = vadd.f32 %v282, %v283
    %v285 = vrot.slane %v86, 4
    %v286 = vadd.f32 %v86, %v285
    %v287 = vrot.slane %v286, 2
    %v288 = vadd.f32 %v286, %v287
    %v289 = vrot.slane %v288, 1
    %v290 = vadd.f32 %v288, %v289
    %v291 = vrot.slane %v87, 4
    %v292 = vadd.f32 %v87, %v291
    %v293 = vrot.slane %v292, 2
    %v294 = vadd.f32 %v292, %v293
    %v295 = vrot.slane %v294, 1
    %v296 = vadd.f32 %v294, %v295
    %v297 = vrot.slane %v88, 4
    %v298 = vadd.f32 %v88, %v297
    %v299 = vrot.slane %v298, 2
    %v300 = vadd.f32 %v298, %v299
    %v301 = vrot.slane %v300, 1
    %v302 = vadd.f32 %v300, %v301
    %v303 = vrot.slane %v89, 4
    %v304 = vadd.f32 %v89, %v303
    %v305 = vrot.slane %v304, 2
    %v306 = vadd.f32 %v304, %v305
    %v307 = vrot.slane %v306, 1
    %v308 = vadd.f32 %v306, %v307
    %v309 = vrot.slane %v90, 4
    %v310 = vadd.f32 %v90, %v309
    %v311 = vrot.slane %v310, 2
    %v312 = vadd.f32 %v310, %v311
    %v313 = vrot.slane %v312, 1
    %v314 = vadd.f32 %v312, %v313
    %v315 = vrot.slane %v91, 4
    %v316 = vadd.f32 %v91, %v315
    %v317 = vrot.slane %v316, 2
    %v318 = vadd.f32 %v316, %v317
    %v319 = vrot.slane %v318, 1
    %v320 = vadd.f32 %v318, %v319
    %v321 = vrot.slane %v92, 4
    %v322 = vadd.f32 %v92, %v321
    %v323 = vrot.slane %v322, 2
    %v324 = vadd.f32 %v322, %v323
    %v325 = vrot.slane %v324, 1
    %v326 = vadd.f32 %v324, %v325
    %v327 = vrot.slane %v93, 4
    %v328 = vadd.f32 %v93, %v327
    %v329 = vrot.slane %v328, 2
    %v330 = vadd.f32 %v328, %v329
    %v331 = vrot.slane %v330, 1
    %v332 = vadd.f32 %v330, %v331
    %v333 = vrot.slane %v94, 4
    %v334 = vadd.f32 %v94, %v333
    %v335 = vrot.slane %v334, 2
    %v336 = vadd.f32 %v334, %v335
    %v337 = vrot.slane %v336, 1
    %v338 = vadd.f32 %v336, %v337
    %v339 = vrot.slane %v95, 4
    %v340 = vadd.f32 %v95, %v339
    %v341 = vrot.slane %v340, 2
    %v342 = vadd.f32 %v340, %v341
    %v343 = vrot.slane %v342, 1
    %v344 = vadd.f32 %v342, %v343
    %v345 = vrot.slane %v96, 4
    %v346 = vadd.f32 %v96, %v345
    %v347 = vrot.slane %v346, 2
    %v348 = vadd.f32 %v346, %v347
    %v349 = vrot.slane %v348, 1
    %v350 = vadd.f32 %v348, %v349
    %v351 = vrot.slane %v97, 4
    %v352 = vadd.f32 %v97, %v351
    %v353 = vrot.slane %v352, 2
    %v354 = vadd.f32 %v352, %v353
    %v355 = vrot.slane %v354, 1
    %v356 = vadd.f32 %v354, %v355
    %v357 = vrot.slane %v98, 4
    %v358 = vadd.f32 %v98, %v357
    %v359 = vrot.slane %v358, 2
    %v360 = vadd.f32 %v358, %v359
    %v361 = vrot.slane %v360, 1
    %v362 = vadd.f32 %v360, %v361
    %v363 = vrot.slane %v99, 4
    %v364 = vadd.f32 %v99, %v363
    %v365 = vrot.slane %v364, 2
    %v366 = vadd.f32 %v364, %v365
    %v367 = vrot.slane %v366, 1
    %v368 = vadd.f32 %v366, %v367
    %v369 = vrot.slane %v100, 4
    %v370 = vadd.f32 %v100, %v369
    %v371 = vrot.slane %v370, 2
    %v372 = vadd.f32 %v370, %v371
    %v373 = vrot.slane %v372, 1
    %v374 = vadd.f32 %v372, %v373
    %v375 = vrot.slane %v101, 4
    %v376 = vadd.f32 %v101, %v375
    %v377 = vrot.slane %v376, 2
    %v378 = vadd.f32 %v376, %v377
    %v379 = vrot.slane %v378, 1
    %v380 = vadd.f32 %v378, %v379
    %v381 = vrot.slane %v102, 4
    %v382 = vadd.f32 %v102, %v381
    %v383 = vrot.slane %v382, 2
    %v384 = vadd.f32 %v382, %v383
    %v385 = vrot.slane %v384, 1
    %v386 = vadd.f32 %v384, %v385
    %v387 = vrot.slane %v103, 4
    %v388 = vadd.f32 %v103, %v387
    %v389 = vrot.slane %v388, 2
    %v390 = vadd.f32 %v388, %v389
    %v391 = vrot.slane %v390, 1
    %v392 = vadd.f32 %v390, %v391
    %v393 = vrot.slane %v104, 4
    %v394 = vadd.f32 %v104, %v393
    %v395 = vrot.slane %v394, 2
    %v396 = vadd.f32 %v394, %v395
    %v397 = vrot.slane %v396, 1
    %v398 = vadd.f32 %v396, %v397
    %vm447 = vcmask 1041409
    %v448 = vsel %vm447, %v152, %v116
    %vm449 = vcmask 1042434
    %v450 = vsel %vm449, %v188, %v448
    %vm451 = vcmask 1043459
    %v452 = vsel %vm451, %v224, %v450
    %vm453 = vcmask 1044484
    %v454 = vsel %vm453, %v260, %v452
    %vm455 = vcmask 1045509
    %v456 = vsel %vm455, %v296, %v454
    %vm457 = vcmask 1046534
    %v458 = vsel %vm457, %v332, %v456
    %vm459 = vcmask 1047559
    %v460 = vsel %vm459, %v368, %v458
    %v461 = vsel %vm447, %v158, %v122
    %v462 = vsel %vm449, %v194, %v461
    %v463 = vsel %vm451, %v230, %v462
    %v464 = vsel %vm453, %v266, %v463
    %v465 = vsel %vm455, %v302, %v464
    %v466 = vsel %vm457, %v338, %v465
    %v467 = vsel %vm459, %v374, %v466
    %v468 = vsel %vm447, %v164, %v128
    %v469 = vsel %vm449, %v200, %v468
    %v470 = vsel %vm451, %v236, %v469
    %v471 = vsel %vm453, %v272, %v470
    %v472 = vsel %vm455, %v308, %v471
    %v473 = vsel %vm457, %v344, %v472
    %v474 = vsel %vm459, %v380, %v473
    %v475 = vsel %vm447, %v170, %v134
    %v476 = vsel %vm449, %v206, %v475
    %v477 = vsel %vm451, %v242, %v476
    %v478 = vsel %vm453, %v278, %v477
    %v479 = vsel %vm455, %v314, %v478
    %v480 = vsel %vm457, %v350, %v479
    %v481 = vsel %vm459, %v386, %v480
    %v482 = vsel %vm447, %v176, %v140
    %v483 = vsel %vm449, %v212, %v482
    %v484 = vsel %vm451, %v248, %v483
    %v485 = vsel %vm453, %v284, %v484
    %v486 = vsel %vm455, %v320, %v485
    %v487 = vsel %vm457, %v356, %v486
    %v488 = vsel %vm459, %v392, %v487
    %v489 = vsel %vm447, %v182, %v146
    %v490 = vsel %vm449, %v218, %v489
    %v491 = vsel %vm451, %v254, %v490
    %v492 = vsel %vm453, %v290, %v491
    %v493 = vsel %vm455, %v326, %v492
    %v494 = vsel %vm457, %v362, %v493
    %v495 = vsel %vm459, %v398, %v494
    %v502 = vadd.f32 %v105, %v460
    %v503 = vadd.f32 %v106, %v467
    %v504 = vadd.f32 %v107, %v474
    %v505 = vadd.f32 %v108, %v481
    %v506 = vadd.f32 %v109, %v488
    %v507 = vadd.f32 %v110, %v495
    %508 = vst [vmem:[#allocation2] sm:$0xff] %v502
    %509 = vst [vmem:[#allocation2 + $0x8] sm:$0xff] %v503
    %510 = vst [vmem:[#allocation2 + $0x10] sm:$0xff] %v504
    %511 = vst [vmem:[#allocation2 + $0x18] sm:$0xff] %v505
    %512 = vst [vmem:[#allocation2 + $0x20] sm:$0xff] %v506
    %513 = vst [vmem:[#allocation2 + $0x28] sm:$0xff] %v507
    // Predicated region
    $region26: #{tpu_custom_call.1} parent=1 // pred_check
      %p514 = pneg %p47
    $region27: #{tpu_custom_call.1} parent=1 // pred_check_branch
      %516 = sbr.rel (%p514) target = $region29
    $region28: #{tpu_custom_call.1} parent=1 // pred_region
      %v517 = vld [vmem:[#allocation2] sm:$0xff]
      %v518 = vld [vmem:[#allocation2 + $0x8] sm:$0xff]
      %v519 = vld [vmem:[#allocation2 + $0x10] sm:$0xff]
      %v520 = vld [vmem:[#allocation2 + $0x18] sm:$0xff]
      %v521 = vld [vmem:[#allocation2 + $0x20] sm:$0xff]
      %v522 = vld [vmem:[#allocation2 + $0x28] sm:$0xff]
      %v523 = vmul.f32 %v517, 0.125
      %v524 = vmul.f32 %v518, 0.125
      %v525 = vmul.f32 %v519, 0.125
      %v526 = vmul.f32 %v520, 0.125
      %v527 = vmul.f32 %v521, 0.125
      %v528 = vmul.f32 %v522, 0.125
      %v529 = vld [vmem:[#allocation6] sm:$0xff]
      %v530 = vld [vmem:[#allocation6 + $0x8] sm:$0xff]
      %v531 = vld [vmem:[#allocation6 + $0x10] sm:$0xff]
      %v532 = vld [vmem:[#allocation6 + $0x18] sm:$0xff]
      %v533 = vld [vmem:[#allocation6 + $0x20] sm:$0xff]
      %v534 = vld [vmem:[#allocation6 + $0x28] sm:$0xff]
      %v535 = vld [vmem:[#allocation6 + $0x30] sm:$0xff]
      %v536 = vld [vmem:[#allocation6 + $0x38] sm:$0xff]
      %v537 = vld [vmem:[#allocation6 + $0x40] sm:$0xff]
      %v538 = vld [vmem:[#allocation6 + $0x48] sm:$0xff]
      %v539 = vld [vmem:[#allocation6 + $0x50] sm:$0xff]
      %v540 = vld [vmem:[#allocation6 + $0x58] sm:$0xff]
      %v541 = vld [vmem:[#allocation6 + $0x60] sm:$0xff]
      %v542 = vld [vmem:[#allocation6 + $0x68] sm:$0xff]
      %v543 = vld [vmem:[#allocation6 + $0x70] sm:$0xff]
      %v544 = vld [vmem:[#allocation6 + $0x78] sm:$0xff]
      %v545 = vld [vmem:[#allocation6 + $0x80] sm:$0xff]
      %v546 = vld [vmem:[#allocation6 + $0x88] sm:$0xff]
      %v547 = vld [vmem:[#allocation6 + $0x90] sm:$0xff]
      %v548 = vld [vmem:[#allocation6 + $0x98] sm:$0xff]
      %v549 = vld [vmem:[#allocation6 + $0xa0] sm:$0xff]
      %v550 = vld [vmem:[#allocation6 + $0xa8] sm:$0xff]
      %v551 = vld [vmem:[#allocation6 + $0xb0] sm:$0xff]
      %v552 = vld [vmem:[#allocation6 + $0xb8] sm:$0xff]
      %v553 = vld [vmem:[#allocation6 + $0xc0] sm:$0xff]
      %v554 = vld [vmem:[#allocation6 + $0xc8] sm:$0xff]
      %v555 = vld [vmem:[#allocation6 + $0xd0] sm:$0xff]
      %v556 = vld [vmem:[#allocation6 + $0xd8] sm:$0xff]
      %v557 = vld [vmem:[#allocation6 + $0xe0] sm:$0xff]
      %v558 = vld [vmem:[#allocation6 + $0xe8] sm:$0xff]
      %v559 = vld [vmem:[#allocation6 + $0xf0] sm:$0xff]
      %v560 = vld [vmem:[#allocation6 + $0xf8] sm:$0xff]
      %v561 = vld [vmem:[#allocation6 + $0x100] sm:$0xff]
      %v562 = vld [vmem:[#allocation6 + $0x108] sm:$0xff]
      %v563 = vld [vmem:[#allocation6 + $0x110] sm:$0xff]
      %v564 = vld [vmem:[#allocation6 + $0x118] sm:$0xff]
      %v565 = vld [vmem:[#allocation6 + $0x120] sm:$0xff]
      %v566 = vld [vmem:[#allocation6 + $0x128] sm:$0xff]
      %v567 = vld [vmem:[#allocation6 + $0x130] sm:$0xff]
      %v568 = vld [vmem:[#allocation6 + $0x138] sm:$0xff]
      %v569 = vld [vmem:[#allocation6 + $0x140] sm:$0xff]
      %v570 = vld [vmem:[#allocation6 + $0x148] sm:$0xff]
      %v571 = vld [vmem:[#allocation6 + $0x150] sm:$0xff]
      %v572 = vld [vmem:[#allocation6 + $0x158] sm:$0xff]
      %v573 = vld [vmem:[#allocation6 + $0x160] sm:$0xff]
      %v574 = vld [vmem:[#allocation6 + $0x168] sm:$0xff]
      %v575 = vld [vmem:[#allocation6 + $0x170] sm:$0xff]
      %v576 = vld [vmem:[#allocation6 + $0x178] sm:$0xff]
      %v577 = vld [vmem:[#allocation6 + $0x180] sm:$0xff]
      %v578 = vld [vmem:[#allocation6 + $0x188] sm:$0xff]
      %v579 = vld [vmem:[#allocation6 + $0x190] sm:$0xff]
      %v580 = vld [vmem:[#allocation6 + $0x198] sm:$0xff]
      %v581 = vld [vmem:[#allocation6 + $0x1a0] sm:$0xff]
      %v582 = vld [vmem:[#allocation6 + $0x1a8] sm:$0xff]
      %v583 = vld [vmem:[#allocation6 + $0x1b0] sm:$0xff]
      %v584 = vld [vmem:[#allocation6 + $0x1b8] sm:$0xff]
      %v585 = vld [vmem:[#allocation6 + $0x1c0] sm:$0xff]
      %v586 = vld [vmem:[#allocation6 + $0x1c8] sm:$0xff]
      %v587 = vld [vmem:[#allocation6 + $0x1d0] sm:$0xff]
      %v588 = vld [vmem:[#allocation6 + $0x1d8] sm:$0xff]
      %v589 = vld [vmem:[#allocation6 + $0x1e0] sm:$0xff]
      %v590 = vld [vmem:[#allocation6 + $0x1e8] sm:$0xff]
      %v591 = vld [vmem:[#allocation6 + $0x1f0] sm:$0xff]
      %v592 = vld [vmem:[#allocation6 + $0x1f8] sm:$0xff]
      %v593 = vld [vmem:[#allocation6 + $0x200] sm:$0xff]
      %v594 = vld [vmem:[#allocation6 + $0x208] sm:$0xff]
      %v595 = vld [vmem:[#allocation6 + $0x210] sm:$0xff]
      %v596 = vld [vmem:[#allocation6 + $0x218] sm:$0xff]
      %v597 = vld [vmem:[#allocation6 + $0x220] sm:$0xff]
      %v598 = vld [vmem:[#allocation6 + $0x228] sm:$0xff]
      %v599 = vld [vmem:[#allocation6 + $0x230] sm:$0xff]
      %v600 = vld [vmem:[#allocation6 + $0x238] sm:$0xff]
      %v601 = vld [vmem:[#allocation6 + $0x240] sm:$0xff]
      %v602 = vld [vmem:[#allocation6 + $0x248] sm:$0xff]
      %v603 = vld [vmem:[#allocation6 + $0x250] sm:$0xff]
      %v604 = vld [vmem:[#allocation6 + $0x258] sm:$0xff]
      %v605 = vld [vmem:[#allocation6 + $0x260] sm:$0xff]
      %v606 = vld [vmem:[#allocation6 + $0x268] sm:$0xff]
      %v607 = vld [vmem:[#allocation6 + $0x270] sm:$0xff]
      %v608 = vld [vmem:[#allocation6 + $0x278] sm:$0xff]
      %v609 = vld [vmem:[#allocation6 + $0x280] sm:$0xff]
      %v610 = vld [vmem:[#allocation6 + $0x288] sm:$0xff]
      %v611 = vld [vmem:[#allocation6 + $0x290] sm:$0xff]
      %v612 = vld [vmem:[#allocation6 + $0x298] sm:$0xff]
      %v613 = vld [vmem:[#allocation6 + $0x2a0] sm:$0xff]
      %v614 = vld [vmem:[#allocation6 + $0x2a8] sm:$0xff]
      %v615 = vld [vmem:[#allocation6 + $0x2b0] sm:$0xff]
      %v616 = vld [vmem:[#allocation6 + $0x2b8] sm:$0xff]
      %v617 = vld [vmem:[#allocation6 + $0x2c0] sm:$0xff]
      %v618 = vld [vmem:[#allocation6 + $0x2c8] sm:$0xff]
      %v619 = vld [vmem:[#allocation6 + $0x2d0] sm:$0xff]
      %v620 = vld [vmem:[#allocation6 + $0x2d8] sm:$0xff]
      %v621 = vld [vmem:[#allocation6 + $0x2e0] sm:$0xff]
      %v622 = vld [vmem:[#allocation6 + $0x2e8] sm:$0xff]
      %v623 = vld [vmem:[#allocation6 + $0x2f0] sm:$0xff]
      %v624 = vld [vmem:[#allocation6 + $0x2f8] sm:$0xff]
      %v625 = vld [vmem:[%s2] sm:$0x1]
      %v627 = vperm.slane %v625, 0
      %629 = vmatpush.msra.mxu0 %v544
      %630 = vmatpush.msra.mxu0 %v543
      %631 = vmatpush.msra.mxu0 %v542
      %632 = vmatpush.msra.mxu0 %v541
      %633 = vmatpush.msra.mxu0 %v540
      %634 = vmatpush.msra.mxu0 %v539
      %635 = vmatpush.msra.mxu0 %v538
      %636 = vmatpush.msra.mxu0 %v537
      %637 = vmatpush.msra.mxu0 %v536
      %638 = vmatpush.msra.mxu0 %v535
      %639 = vmatpush.msra.mxu0 %v534
      %640 = vmatpush.msra.mxu0 %v533
      %641 = vmatpush.msra.mxu0 %v532
      %642 = vmatpush.msra.mxu0 %v531
      %643 = vmatpush.msra.mxu0 %v530
      %644 = vmatpush.msra.mxu0 %v529
      %645 = vmatmul.f32.gmra.mxu0 %v523
      %v646 = vpop.f32.mrf.mxu0
      %v647 = vadd.f32 %v627, %v646
      %648 = vdwg.mxu0
      %649 = vmatpush.msra.mxu0 %v560
      %650 = vmatpush.msra.mxu0 %v559
      %651 = vmatpush.msra.mxu0 %v558
      %652 = vmatpush.msra.mxu0 %v557
      %653 = vmatpush.msra.mxu0 %v556
      %654 = vmatpush.msra.mxu0 %v555
      %655 = vmatpush.msra.mxu0 %v554
      %656 = vmatpush.msra.mxu0 %v553
      %657 = vmatpush.msra.mxu0 %v552
      %658 = vmatpush.msra.mxu0 %v551
      %659 = vmatpush.msra.mxu0 %v550
      %660 = vmatpush.msra.mxu0 %v549
      %661 = vmatpush.msra.mxu0 %v548
      %662 = vmatpush.msra.mxu0 %v547
      %663 = vmatpush.msra.mxu0 %v546
      %664 = vmatpush.msra.mxu0 %v545
      %665 = vmatmul.f32.gmra.mxu0 %v524
      %v666 = vpop.f32.mrf.mxu0
      %v667 = vadd.f32 %v647, %v666
      %668 = vdwg.mxu0
      %669 = vmatpush.msra.mxu0 %v576
      %670 = vmatpush.msra.mxu0 %v575
      %671 = vmatpush.msra.mxu0 %v574
      %672 = vmatpush.msra.mxu0 %v573
      %673 = vmatpush.msra.mxu0 %v572
      %674 = vmatpush.msra.mxu0 %v571
      %675 = vmatpush.msra.mxu0 %v570
      %676 = vmatpush.msra.mxu0 %v569
      %677 = vmatpush.msra.mxu0 %v568
      %678 = vmatpush.msra.mxu0 %v567
      %679 = vmatpush.msra.mxu0 %v566
      %680 = vmatpush.msra.mxu0 %v565
      %681 = vmatpush.msra.mxu0 %v564
      %682 = vmatpush.msra.mxu0 %v563
      %683 = vmatpush.msra.mxu0 %v562
      %684 = vmatpush.msra.mxu0 %v561
      %685 = vmatmul.f32.gmra.mxu0 %v525
      %v686 = vpop.f32.mrf.mxu0
      %v687 = vadd.f32 %v667, %v686
      %688 = vdwg.mxu0
      %689 = vmatpush.msra.mxu0 %v592
      %690 = vmatpush.msra.mxu0 %v591
      %691 = vmatpush.msra.mxu0 %v590
      %692 = vmatpush.msra.mxu0 %v589
      %693 = vmatpush.msra.mxu0 %v588
      %694 = vmatpush.msra.mxu0 %v587
      %695 = vmatpush.msra.mxu0 %v586
      %696 = vmatpush.msra.mxu0 %v585
      %697 = vmatpush.msra.mxu0 %v584
      %698 = vmatpush.msra.mxu0 %v583
      %699 = vmatpush.msra.mxu0 %v582
      %700 = vmatpush.msra.mxu0 %v581
      %701 = vmatpush.msra.mxu0 %v580
      %702 = vmatpush.msra.mxu0 %v579
      %703 = vmatpush.msra.mxu0 %v578
      %704 = vmatpush.msra.mxu0 %v577
      %705 = vmatmul.f32.gmra.mxu0 %v526
      %v706 = vpop.f32.mrf.mxu0
      %v707 = vadd.f32 %v687, %v706
      %708 = vdwg.mxu0
      %709 = vmatpush.msra.mxu0 %v608
      %710 = vmatpush.msra.mxu0 %v607
      %711 = vmatpush.msra.mxu0 %v606
      %712 = vmatpush.msra.mxu0 %v605
      %713 = vmatpush.msra.mxu0 %v604
      %714 = vmatpush.msra.mxu0 %v603
      %715 = vmatpush.msra.mxu0 %v602
      %716 = vmatpush.msra.mxu0 %v601
      %717 = vmatpush.msra.mxu0 %v600
      %718 = vmatpush.msra.mxu0 %v599
      %719 = vmatpush.msra.mxu0 %v598
      %720 = vmatpush.msra.mxu0 %v597
      %721 = vmatpush.msra.mxu0 %v596
      %722 = vmatpush.msra.mxu0 %v595
      %723 = vmatpush.msra.mxu0 %v594
      %724 = vmatpush.msra.mxu0 %v593
      %725 = vmatmul.f32.gmra.mxu0 %v527
      %v726 = vpop.f32.mrf.mxu0
      %v727 = vadd.f32 %v707, %v726
      %728 = vdwg.mxu0
      %729 = vmatpush.msra.mxu0 %v624
      %730 = vmatpush.msra.mxu0 %v623
      %731 = vmatpush.msra.mxu0 %v622
      %732 = vmatpush.msra.mxu0 %v621
      %733 = vmatpush.msra.mxu0 %v620
      %734 = vmatpush.msra.mxu0 %v619
      %735 = vmatpush.msra.mxu0 %v618
      %736 = vmatpush.msra.mxu0 %v617
      %737 = vmatpush.msra.mxu0 %v616
      %738 = vmatpush.msra.mxu0 %v615
      %739 = vmatpush.msra.mxu0 %v614
      %740 = vmatpush.msra.mxu0 %v613
      %741 = vmatpush.msra.mxu0 %v612
      %742 = vmatpush.msra.mxu0 %v611
      %743 = vmatpush.msra.mxu0 %v610
      %744 = vmatpush.msra.mxu0 %v609
      %745 = vmatmul.f32.gmra.mxu0 %v528
      %v746 = vpop.f32.mrf.mxu0
      %v747 = vadd.f32 %v727, %v746
      %748 = vdwg.mxu0
      %749 = vst [vmem:[#allocation8] sm:$0xff] %v747
    $region29: #{tpu_custom_call.1} parent=1 // pred_fallthru
      _
    // Predicated region
    $region30: #{tpu_custom_call.1} parent=1 // pred_check
      _
    $region31: #{tpu_custom_call.1} parent=1 // pred_check_branch
      %751 = sbr.rel (0) target = $region33
    $region32: #{tpu_custom_call.1} parent=1 // pred_region
      %753 = vsyncadd [#allocation5], 0
      %s755 = sshll.u32 [#allocation8], 4
      %s756 = int_to_ptr.vmem [resolvable:$true] %s755
      %s757 = sshll.u32 %s3, 4
      %s758 = int_to_ptr.hbm [resolvable:$true] %s757
      %760 = dma.vmem_to_hbm [thread:$0]  %s756, 128, %s758, [#allocation5]
    $region33: #{tpu_custom_call.1} parent=1 // pred_fallthru
      _
    // Predicated region
    $region34: #{tpu_custom_call.1} parent=1 // pred_check
      _
    $region35: #{tpu_custom_call.1} parent=1 // pred_check_branch
      %762 = sbr.rel (0) target = $region37
    $region36: #{tpu_custom_call.1} parent=1 // pred_region
      %764 = dma.done [#allocation5], 128
    $region37: #{tpu_custom_call.1} parent=1 // pred_fallthru
      _
    %765 = vsyncpa [#allocation4], 1
    %766 = vsyncpa [#allocation7], 1
    %767 = vsyncpa [#allocation5], 1

</llo_original>
